<compile_context>
chip_gen: v7x
topology: tpu7x:2x2x1
jax: 0.10.0
libtpu: 0.0.40
codegen_flags: <defaults>
</compile_context>

<pallas_src>
import functools

import jax
import jax.numpy as jnp
from jax.experimental import pallas as pl
from jax.experimental.pallas import tpu as pltpu

LN_EPS = 1e-12  # BERT layer-norm eps
VMEM_LIMIT = 32 * 1024 * 1024  # safe on v5e/v6e/v7x; raise + tile FFN at BERT-base sizes


def _pick_tile(n, cap):
    """Largest tile <= cap that divides n and is a multiple of 8 (or the full dim)."""
    if n <= cap:
        return n
    for c in range(cap, 7, -1):
        if n % c == 0 and c % 8 == 0:
            return c
    return n


# ---------------------------------------------------------------------------
# Row-tiled LayerNorm kernel (embedding layer norm)
# ---------------------------------------------------------------------------
def _ln_kernel(x_ref, g_ref, b_ref, o_ref):
    x = x_ref[...]
    mu = jnp.mean(x, axis=-1, keepdims=True)
    var = jnp.mean(jnp.square(x - mu), axis=-1, keepdims=True)
    o_ref[...] = (x - mu) * jax.lax.rsqrt(var + LN_EPS) * g_ref[...] + b_ref[...]


def layer_norm(x, gamma, beta):
    B, S, H = x.shape
    x2 = x.reshape(B * S, H)
    rt = _pick_tile(B * S, 256)
    out = pl.pallas_call(
        _ln_kernel,
        out_shape=jax.ShapeDtypeStruct((B * S, H), x.dtype),
        grid=(B * S // rt,),
        in_specs=[pl.BlockSpec((rt, H), lambda i: (i, 0)),
                  pl.BlockSpec(gamma.shape, lambda i: (0, 0)),
                  pl.BlockSpec(beta.shape, lambda i: (0, 0))],
        out_specs=pl.BlockSpec((rt, H), lambda i: (i, 0)),
        compiler_params=pltpu.CompilerParams(dimension_semantics=("parallel",)),
    )(x2, gamma, beta)
    return out.reshape(B, S, H)


# ---------------------------------------------------------------------------
# Row-tiled affine kernel: X @ W + b  (bf16 operands, f32 accumulation)
# Used for the hoisted LSTM input projection over all B*T rows.
# ---------------------------------------------------------------------------
def _affine_kernel(x_ref, w_ref, b_ref, o_ref):
    o_ref[...] = (jnp.dot(x_ref[...].astype(jnp.bfloat16), w_ref[...],
                          preferred_element_type=jnp.float32) + b_ref[...])


def affine(x2d, w_bf16, bias):
    N, H = x2d.shape
    K = w_bf16.shape[1]
    rt = _pick_tile(N, 256)
    return pl.pallas_call(
        _affine_kernel,
        out_shape=jax.ShapeDtypeStruct((N, K), jnp.float32),
        grid=(N // rt,),
        in_specs=[pl.BlockSpec((rt, H), lambda i: (i, 0)),
                  pl.BlockSpec((H, K), lambda i: (0, 0)),
                  pl.BlockSpec((1, K), lambda i: (0, 0))],
        out_specs=pl.BlockSpec((rt, K), lambda i: (i, 0)),
        compiler_params=pltpu.CompilerParams(dimension_semantics=("parallel",)),
    )(x2d, w_bf16, bias)


# ---------------------------------------------------------------------------
# Fused transformer encoder layer kernel
#   grid = (batch, query-seq tiles); K/V see the full sequence block.
#   self-attention (head-batched dot_generals) + residual + LN, FFN + residual + LN
# ---------------------------------------------------------------------------
def _encoder_kernel(xq_ref, xkv_ref, wq_ref, bq_ref, wk_ref, bk_ref, wv_ref, bv_ref,
                    wo_ref, bo_ref, g1_ref, be1_ref,
                    w1_ref, b1_ref, w2_ref, b2_ref, g2_ref, be2_ref,
                    o_ref, *, num_heads, head_dim):
    f32, bf16 = jnp.float32, jnp.bfloat16
    nh, dh = num_heads, head_dim

    xq = xq_ref[0]               # (tq, H) f32 — query rows / residual stream
    xkv = xkv_ref[0]             # (S, H)  f32 — full sequence for K/V
    tq, H = xq.shape
    S = xkv.shape[0]

    # Head-batched projections: weights stored head-major (nh, H, dh).  Everything
    # below is a canonical leading-batch dot_general — no in-kernel transposes,
    # no sub-128 lane slicing of q/k/v, no head concat.
    xq_b = jnp.broadcast_to(xq.astype(bf16), (nh, tq, H))
    xkv_b = jnp.broadcast_to(xkv.astype(bf16), (nh, S, H))
    proj = (((2,), (1,)), ((0,), (0,)))
    qh = jax.lax.dot_general(xq_b, wq_ref[...], proj, preferred_element_type=f32) + bq_ref[...]
    kh = jax.lax.dot_general(xkv_b, wk_ref[...], proj, preferred_element_type=f32) + bk_ref[...]
    vh = jax.lax.dot_general(xkv_b, wv_ref[...], proj, preferred_element_type=f32) + bv_ref[...]

    # scores: contract on head_dim directly (no materialized k.T)
    scale = 1.0 / jnp.sqrt(jnp.float32(dh))
    s = jax.lax.dot_general(qh.astype(bf16), kh.astype(bf16),
                            (((2,), (2,)), ((0,), (0,))),
                            preferred_element_type=f32) * scale          # (nh, tq, S)
    # no attention mask: the module's forward passes only input_ids (all-ones mask)
    s = s - jnp.max(s, axis=-1, keepdims=True)
    p = jnp.exp(s)
    p = p * pl.reciprocal(jnp.sum(p, axis=-1, keepdims=True), approx=True)

    ctx = jax.lax.dot_general(p.astype(bf16), vh.astype(bf16),
                              (((2,), (1,)), ((0,), (0,))),
                              preferred_element_type=f32)                # (nh, tq, dh)

    # output projection: per-head (dh -> H), then reduce over the (major) head axis
    attn = jax.lax.dot_general(ctx.astype(bf16), wo_ref[...],
                               (((2,), (1,)), ((0,), (0,))),
                               preferred_element_type=f32)               # (nh, tq, H)
    attn = jnp.sum(attn, axis=0) + bo_ref[...]                           # (tq, H)

    def ln(y, g, b):
        mu = jnp.mean(y, axis=-1, keepdims=True)
        var = jnp.mean(jnp.square(y - mu), axis=-1, keepdims=True)
        return (y - mu) * jax.lax.rsqrt(var + LN_EPS) * g + b

    x1 = ln(xq + attn, g1_ref[...], be1_ref[...])

    # TODO(synk): HF BERT default intermediate_act_fn is erf-GELU; tanh-approx used here.
    ff = jnp.dot(x1.astype(bf16), w1_ref[...], preferred_element_type=f32) + b1_ref[...]
    ff = jax.nn.gelu(ff, approximate=True)
    # TODO(synk): at BERT-base sizes (H=768, I=3072) also tile the FFN over the
    #             intermediate dim (extra grid axis + accumulator scratch) for v7x VMEM.
    ff = jnp.dot(ff.astype(bf16), w2_ref[...], preferred_element_type=f32) + b2_ref[...]

    o_ref[0] = ln(x1 + ff, g2_ref[...], be2_ref[...])


def encoder_layer(x, p, num_heads):
    B, S, H = x.shape
    head_dim = H // num_heads
    tq = _pick_tile(S, 512)
    weights = [p["wq"], p["bq"], p["wk"], p["bk"], p["wv"], p["bv"],
               p["wo"], p["bo"], p["ln1_g"], p["ln1_b"],
               p["w_inter"], p["b_inter"], p["w_out"], p["b_out"],
               p["ln2_g"], p["ln2_b"]]
    in_specs = [pl.BlockSpec((1, tq, H), lambda b, i: (b, i, 0)),   # query tile
                pl.BlockSpec((1, S, H), lambda b, i: (b, 0, 0))]    # full seq for K/V
    in_specs += [pl.BlockSpec(w.shape, lambda b, i, nd=w.ndim: (0,) * nd)
                 for w in weights]
    return pl.pallas_call(
        functools.partial(_encoder_kernel, num_heads=num_heads, head_dim=head_dim),
        out_shape=jax.ShapeDtypeStruct((B, S, H), x.dtype),
        grid=(B, S // tq),
        in_specs=in_specs,
        out_specs=pl.BlockSpec((1, tq, H), lambda b, i: (b, i, 0)),
        compiler_params=pltpu.CompilerParams(
            dimension_semantics=("parallel", "parallel"),
            vmem_limit_bytes=VMEM_LIMIT),
    )(x, x, *weights)


# ---------------------------------------------------------------------------
# LSTM recurrence kernel.  The non-recurrent X @ W_ih + b is precomputed (affine);
# this kernel only does gates_x[t] + h_{t-1} @ W_hh and the gate nonlinearities.
#   grid = (batch blocks ["parallel"], time chunks ["arbitrary"])
#   recurrent (h, c) state lives in VMEM scratch; gate order i, f, g, o (PyTorch).
# ---------------------------------------------------------------------------
def _lstm_recur_kernel(gx_ref, whh_ref, o_ref, h_scr, c_scr, *, hidden, chunk):
    @pl.when(pl.program_id(1) == 0)
    def _():
        h_scr[...] = jnp.zeros_like(h_scr)
        c_scr[...] = jnp.zeros_like(c_scr)

    # statically unrolled chunk of timesteps (amortizes grid-step overhead and lets
    # the scheduler pipeline the short h @ W_hh dependency chain)
    for t in range(chunk):
        gates = gx_ref[:, t, :] + jnp.dot(
            h_scr[...].astype(jnp.bfloat16), whh_ref[...],
            preferred_element_type=jnp.float32)                       # (bb, 4H) f32
        # NOTE: gate slices are lane-aligned whenever hidden % 128 == 0 (true for
        # real BERT hidden sizes); the combined (bb,H)x(H,4H) matmul stays lane-dense.
        i = jax.nn.sigmoid(gates[:, 0:hidden])
        f = jax.nn.sigmoid(gates[:, hidden:2 * hidden])
        g = jnp.tanh(gates[:, 2 * hidden:3 * hidden])
        o = jax.nn.sigmoid(gates[:, 3 * hidden:4 * hidden])
        c = f * c_scr[...] + i * g
        h = o * jnp.tanh(c)
        c_scr[...] = c
        h_scr[...] = h
        o_ref[:, t, :] = h


def lstm_forward(x, wih, whh, bias):
    B, T, H = x.shape
    # 1) hoisted input projection: one MXU-saturating matmul over all B*T rows
    gates_x = affine(x.reshape(B * T, H), wih, bias).reshape(B, T, 4 * H)
    # 2) sequential recurrence on batch-first blocks (no time-major transposes)
    bb = B // 2 if (B % 2 == 0 and B >= 2) else B
    tc = _pick_tile(T, 32)
    return pl.pallas_call(
        functools.partial(_lstm_recur_kernel, hidden=H, chunk=tc),
        out_shape=jax.ShapeDtypeStruct((B, T, H), jnp.float32),
        grid=(B // bb, T // tc),
        in_specs=[pl.BlockSpec((bb, tc, 4 * H), lambda ib, it: (ib, it, 0)),
                  pl.BlockSpec(whh.shape, lambda ib, it: (0, 0))],
        out_specs=pl.BlockSpec((bb, tc, H), lambda ib, it: (ib, it, 0)),
        scratch_shapes=[pltpu.VMEM((bb, H), jnp.float32),
                        pltpu.VMEM((bb, H), jnp.float32)],
        compiler_params=pltpu.CompilerParams(
            dimension_semantics=("parallel", "arbitrary"),
            vmem_limit_bytes=VMEM_LIMIT),
    )(gates_x, whh)


# ---------------------------------------------------------------------------
# Parameter construction (deterministic, synthetic BERT + LSTM)
#   matmul weights stored in bf16 (MXU operands); biases / LN params in f32.
#   attention weights stored head-major: (nh, H, dh) and out-proj (nh, dh, H).
# ---------------------------------------------------------------------------
def init_params(key, *, vocab, max_pos, type_vocab, hidden, heads, inter, layers):
    std = 0.02
    hd = hidden // heads
    keys = iter(jax.random.split(key, 8 + 8 * layers + 4))

    def nrm(shape, dtype=jnp.bfloat16):
        return (std * jax.random.normal(next(keys), shape)).astype(dtype)

    params = {
        "num_heads": heads,
        "word_emb": nrm((vocab, hidden), jnp.float32),
        "pos_emb": nrm((max_pos, hidden), jnp.float32),
        "type_emb": nrm((type_vocab, hidden), jnp.float32),
        "emb_ln_g": jnp.ones((1, hidden), jnp.float32),
        "emb_ln_b": jnp.zeros((1, hidden), jnp.float32),
        "layers": [],
    }
    for _ in range(layers):
        lp = {
            "wq": nrm((heads, hidden, hd)), "bq": jnp.zeros((heads, 1, hd), jnp.float32),
            "wk": nrm((heads, hidden, hd)), "bk": jnp.zeros((heads, 1, hd), jnp.float32),
            "wv": nrm((heads, hidden, hd)), "bv": jnp.zeros((heads, 1, hd), jnp.float32),
            "wo": nrm((heads, hd, hidden)), "bo": jnp.zeros((1, hidden), jnp.float32),
            "ln1_g": jnp.ones((1, hidden), jnp.float32),
            "ln1_b": jnp.zeros((1, hidden), jnp.float32),
            "w_inter": nrm((hidden, inter)), "b_inter": jnp.zeros((1, inter), jnp.float32),
            "w_out": nrm((inter, hidden)), "b_out": jnp.zeros((1, hidden), jnp.float32),
            "ln2_g": jnp.ones((1, hidden), jnp.float32),
            "ln2_b": jnp.zeros((1, hidden), jnp.float32),
        }
        params["layers"].append(lp)

    # LSTM weights pre-transposed: (in, 4H) / (H, 4H) bf16; bias = b_ih + b_hh (f32)
    params["lstm_wih"] = nrm((hidden, 4 * hidden))
    params["lstm_whh"] = nrm((hidden, 4 * hidden))
    params["lstm_b"] = jnp.zeros((1, 4 * hidden), jnp.float32)
    return params


def bert_lstm_forward(input_ids, params):
    B, S = input_ids.shape
    # embedding lookups are glue (gather); hot paths run in Pallas kernels
    emb = (params["word_emb"][input_ids]
           + params["pos_emb"][:S][None, :, :]
           + params["type_emb"][0][None, None, :])
    hidden = layer_norm(emb, params["emb_ln_g"], params["emb_ln_b"])
    for lp in params["layers"]:
        hidden = encoder_layer(hidden, lp, num_heads=params["num_heads"])
    # self.bert(x)[0] -> sequence output;  x, _ = self.lstm(x) -> full sequence of h_t
    return lstm_forward(hidden, params["lstm_wih"], params["lstm_whh"], params["lstm_b"])


if __name__ == "__main__":
    VOCAB, MAX_POS, TYPE_VOCAB = 100, 64, 2
    HIDDEN, HEADS, INTER, LAYERS = 32, 4, 64, 2
    B, S = 2, 8

    key = jax.random.PRNGKey(0)
    k_ids, k_params = jax.random.split(key)
    input_ids = jax.random.randint(k_ids, (B, S), 0, VOCAB, dtype=jnp.int32)
    params = init_params(k_params, vocab=VOCAB, max_pos=MAX_POS, type_vocab=TYPE_VOCAB,
                         hidden=HIDDEN, heads=HEADS, inter=INTER, layers=LAYERS)

    out = bert_lstm_forward(input_ids, params)
    out = jax.block_until_ready(out)
    assert out.shape == (B, S, HIDDEN) and out.dtype == jnp.float32
    print("KERNEL_OK")
</pallas_src>

<mosaic_0001>
module attributes {stable_mosaic.version = 11 : i64} {
  func.func @_ln_kernel(%arg0: i32, %arg1: memref<16x32xf32, #tpu.memory_space<vmem>>, %arg2: memref<1x32xf32, #tpu.memory_space<vmem>>, %arg3: memref<1x32xf32, #tpu.memory_space<vmem>>, %arg4: memref<16x32xf32, #tpu.memory_space<vmem>>) attributes {dimension_semantics = [#tpu.dimension_semantics<parallel>], iteration_bounds = array<i64: 1>, scalar_prefetch = 0 : i64, scratch_operands = 0 : i64, tpu.core_type = #tpu.core_type<tc>, window_params = [{transform_indices = @transform_0, window_bounds = array<i64: 16, 32>}, {pipeline_mode = #tpu.pipeline_mode<synchronous>, transform_indices = @transform_1, window_bounds = array<i64: 1, 32>}, {pipeline_mode = #tpu.pipeline_mode<synchronous>, transform_indices = @transform_2, window_bounds = array<i64: 1, 32>}, {transform_indices = @transform_3, window_bounds = array<i64: 16, 32>}]} {
    %c0 = arith.constant 0 : index
    %c0_0 = arith.constant 0 : index
    %0 = vector.load %arg1[%c0, %c0_0] : memref<16x32xf32, #tpu.memory_space<vmem>>, vector<16x32xf32>
    %cst = arith.constant dense<0.000000e+00> : vector<16xf32>
    %1 = vector.multi_reduction <add>, %0, %cst [1] : vector<16x32xf32> to vector<16xf32>
    %2 = vector.shape_cast %1 : vector<16xf32> to vector<16x1xf32>
    %cst_1 = arith.constant 3.200000e+01 : f32
    %3 = vector.broadcast %cst_1 : f32 to vector<16x1xf32>
    %4 = arith.divf %2, %3 : vector<16x1xf32>
    %5 = vector.broadcast %4 : vector<16x1xf32> to vector<16x32xf32>
    %6 = arith.subf %0, %5 : vector<16x32xf32>
    %7 = arith.mulf %6, %6 : vector<16x32xf32>
    %cst_2 = arith.constant dense<0.000000e+00> : vector<16xf32>
    %8 = vector.multi_reduction <add>, %7, %cst_2 [1] : vector<16x32xf32> to vector<16xf32>
    %9 = vector.shape_cast %8 : vector<16xf32> to vector<16x1xf32>
    %cst_3 = arith.constant 3.200000e+01 : f32
    %10 = vector.broadcast %cst_3 : f32 to vector<16x1xf32>
    %11 = arith.divf %9, %10 : vector<16x1xf32>
    %12 = vector.broadcast %4 : vector<16x1xf32> to vector<16x32xf32>
    %13 = arith.subf %0, %12 : vector<16x32xf32>
    %cst_4 = arith.constant 9.99999996E-13 : f32
    %14 = vector.broadcast %cst_4 : f32 to vector<16x1xf32>
    %15 = arith.addf %11, %14 : vector<16x1xf32>
    %16 = math.rsqrt %15 : vector<16x1xf32>
    %17 = vector.broadcast %16 : vector<16x1xf32> to vector<16x32xf32>
    %18 = arith.mulf %13, %17 : vector<16x32xf32>
    %c0_5 = arith.constant 0 : index
    %c0_6 = arith.constant 0 : index
    %19 = vector.load %arg2[%c0_5, %c0_6] : memref<1x32xf32, #tpu.memory_space<vmem>>, vector<1x32xf32>
    %20 = vector.broadcast %19 : vector<1x32xf32> to vector<16x32xf32>
    %21 = arith.mulf %18, %20 : vector<16x32xf32>
    %c0_7 = arith.constant 0 : index
    %c0_8 = arith.constant 0 : index
    %22 = vector.load %arg3[%c0_7, %c0_8] : memref<1x32xf32, #tpu.memory_space<vmem>>, vector<1x32xf32>
    %23 = vector.broadcast %22 : vector<1x32xf32> to vector<16x32xf32>
    %24 = arith.addf %21, %23 : vector<16x32xf32>
    %c0_9 = arith.constant 0 : index
    %c0_10 = arith.constant 0 : index
    %25 = vector.load %arg4[%c0_9, %c0_10] : memref<16x32xf32, #tpu.memory_space<vmem>>, vector<16x32xf32>
    tpu.vector_store %arg4[%c0_9, %c0_10], %24 {strides = array<i32>} : memref<16x32xf32, #tpu.memory_space<vmem>>, vector<16x32xf32>,
    return
  }
  func.func @transform_0(%arg0: i32) -> (i32, i32) {
    %c0_i32 = arith.constant 0 : i32
    %c0_i32_0 = arith.constant 0 : i32
    return %arg0, %c0_i32 : i32, i32
  }
  func.func @transform_1(%arg0: i32) -> (i32, i32) {
    %c0_i32 = arith.constant 0 : i32
    %c0_i32_0 = arith.constant 0 : i32
    %c0_i32_1 = arith.constant 0 : i32
    return %c0_i32, %c0_i32_0 : i32, i32
  }
  func.func @transform_2(%arg0: i32) -> (i32, i32) {
    %c0_i32 = arith.constant 0 : i32
    %c0_i32_0 = arith.constant 0 : i32
    %c0_i32_1 = arith.constant 0 : i32
    return %c0_i32, %c0_i32_0 : i32, i32
  }
  func.func @transform_3(%arg0: i32) -> (i32, i32) {
    %c0_i32 = arith.constant 0 : i32
    %c0_i32_0 = arith.constant 0 : i32
    return %arg0, %c0_i32 : i32, i32
  }
}

</mosaic_0001>

<llo_original>
// kernel: tpu_custom_call.1
$region0: #{tpu_custom_call.1}
  #allocation0 [shape = 'u32[]', space=smem, size = 0x4, offset = 0x4, fixed_abs, tag = 'smem constant byte address 0x4 - core index']
  #allocation1 [shape = 'u32[144,128]{1,0:T(1,128)}', space=vmem, size = 0x12000, scoped, tag = 'internal scratch']
  %s0 = inlined_call_operand.hbm [shape: f32[16,32], index: 0, kind: input, shape index: {}]
  %s1 = inlined_call_operand.vmem [shape: f32[1,32], index: 1, kind: input, shape index: {}]
  %s2 = inlined_call_operand.vmem [shape: f32[1,32], index: 2, kind: input, shape index: {}]
  %s3 = inlined_call_operand.hbm [shape: f32[16,32], index: 3, kind: output, shape index: {}]
  %s4 = sld [smem:[#allocation0]]
  $region26: #{tpu_custom_call.1} parent=0
    _
  %s6 = ssub.s32 1, %s4
  %s7 = scalar_select 0, %s6, %s4
  $region1: #{tpu_custom_call.1} parent=0
    #allocation2 [shape = 'u8[8192]{0}', space=vmem, size = 0x2000, scoped, tag = 'input window, operand 0, single buffered']
    #allocation3 [shape = 's32[1]{0}', space=sflag, size = 0x4, scoped, tag = 'scoped memory for tpu_custom_call.1']
    #allocation4 [shape = 's32[1]{0}', space=sflag, size = 0x4, scoped, tag = 'scoped memory for tpu_custom_call.1']
    #allocation5 [shape = 'u8[8192]{0}', space=vmem, size = 0x2000, scoped, tag = 'output window, operand 0, single buffered']
    %8 = vsyncpa [#allocation3], 0
    %9 = vsyncpa [#allocation4], 0
    // Predicated region
    $region2: #{tpu_custom_call.1} parent=1 // pred_check
      _
    $region3: #{tpu_custom_call.1} parent=1 // pred_check_branch
      %11 = sbr.rel (0) target = $region5
    $region4: #{tpu_custom_call.1} parent=1 // pred_region
      %s13 = ssub.s32 256, 256
      %14 = vsyncadd [#allocation3], %s13
      %s15 = sshll.u32 [#allocation2], 4
      %s16 = int_to_ptr.vmem [resolvable:$true] %s15
      %21 = dma.hbm_to_vmem [thread:$0]  %s0, 256, %s16, [#allocation3], 128, 128, 8
    $region5: #{tpu_custom_call.1} parent=1 // pred_fallthru
      _
    // Predicated region
    $region6: #{tpu_custom_call.1} parent=1 // pred_check
      _
    $region7: #{tpu_custom_call.1} parent=1 // pred_check_branch
      %23 = sbr.rel (0) target = $region9
    $region8: #{tpu_custom_call.1} parent=1 // pred_region
      _
    $region9: #{tpu_custom_call.1} parent=1 // pred_fallthru
      _
    // Predicated region
    $region10: #{tpu_custom_call.1} parent=1 // pred_check
      _
    $region11: #{tpu_custom_call.1} parent=1 // pred_check_branch
      %25 = sbr.rel (0) target = $region13
    $region12: #{tpu_custom_call.1} parent=1 // pred_region
      _
    $region13: #{tpu_custom_call.1} parent=1 // pred_fallthru
      _
    // Predicated region
    $region14: #{tpu_custom_call.1} parent=1 // pred_check
      _
    $region15: #{tpu_custom_call.1} parent=1 // pred_check_branch
      %27 = sbr.rel (0) target = $region17
    $region16: #{tpu_custom_call.1} parent=1 // pred_region
      %28 = dma.done [#allocation3], 256
    $region17: #{tpu_custom_call.1} parent=1 // pred_fallthru
      _
    %v29 = vld [vmem:[#allocation2] sm:$0xff]
    %v30 = vld [vmem:[#allocation2 + $0x8] sm:$0xff]
    %vm31 = vcmask 261120
    %v32 = vsel %vm31, %v29, 0.0
    %33 = vadd.xlane.f32.xlu0 %v32
    %v34 = vpop.xlane.xlu0 %33
    %v35 = vsel %vm31, %v30, 0.0
    %36 = vadd.xlane.f32.xlu0 %v35
    %v37 = vpop.xlane.xlu0 %36
    %v38 = vrcp.pop 32.0
    %v39 = vmul.f32 %v34, %v38
    %v40 = vmul.f32 %v37, %v38
    %v41 = vsub.f32 %v29, %v39
    %v42 = vsub.f32 %v30, %v40
    %v43 = vmul.f32 %v41, %v41
    %v44 = vmul.f32 %v42, %v42
    %v45 = vsel %vm31, %v43, 0.0
    %46 = vadd.xlane.f32.xlu0 %v45
    %v47 = vpop.xlane.xlu0 %46
    %v48 = vsel %vm31, %v44, 0.0
    %49 = vadd.xlane.f32.xlu0 %v48
    %v50 = vpop.xlane.xlu0 %49
    %v51 = vmul.f32 %v47, %v38
    %v52 = vmul.f32 %v50, %v38
    %v53 = vadd.f32 %v51, 1e-12
    %v54 = vadd.f32 %v52, 1e-12
    %v55 = vrsqrt.pop %v53
    %v56 = vrsqrt.pop %v54
    %v57 = vmul.f32 %v41, %v55
    %v58 = vmul.f32 %v42, %v56
    %v59 = vld [vmem:[%s1] sm:$0x1]
    %v61 = vlaneseq
    %v62 = vshrl.u32 %v61, 7
    %v63 = vsub.s32 0, %v62
    %v64 = vrot.slane %v59, %v63
    %v66 = vmul.f32 %v57, %v64
    %v67 = vmul.f32 %v58, %v64
    %v68 = vld [vmem:[%s2] sm:$0x1]
    %v70 = vlaneseq
    %v71 = vshrl.u32 %v70, 7
    %v72 = vsub.s32 0, %v71
    %v73 = vrot.slane %v68, %v72
    %v75 = vadd.f32 %v66, %v73
    %v76 = vadd.f32 %v67, %v73
    %77 = vst.msk [vmem:[#allocation5] sm:$0xff] %vm31, %v75
    %78 = vst.msk [vmem:[#allocation5 + $0x8] sm:$0xff] %vm31, %v76
    // Predicated region
    $region18: #{tpu_custom_call.1} parent=1 // pred_check
      _
    $region19: #{tpu_custom_call.1} parent=1 // pred_check_branch
      %80 = sbr.rel (0) target = $region21
    $region20: #{tpu_custom_call.1} parent=1 // pred_region
      %s82 = ssub.s32 256, 256
      %83 = vsyncadd [#allocation4], %s82
      %s84 = sshll.u32 [#allocation5], 4
      %s85 = int_to_ptr.vmem [resolvable:$true] %s84
      %90 = dma.vmem_to_hbm [thread:$0]  %s85, 256, %s3, [#allocation4], 128, 128, 8
    $region21: #{tpu_custom_call.1} parent=1 // pred_fallthru
      _
    // Predicated region
    $region22: #{tpu_custom_call.1} parent=1 // pred_check
      _
    $region23: #{tpu_custom_call.1} parent=1 // pred_check_branch
      %92 = sbr.rel (0) target = $region25
    $region24: #{tpu_custom_call.1} parent=1 // pred_region
      %93 = dma.done [#allocation4], 256
    $region25: #{tpu_custom_call.1} parent=1 // pred_fallthru
      _
    %94 = vsyncpa [#allocation3], 1
    %95 = vsyncpa [#allocation4], 1

</llo_original>
